<compile_context>
chip_gen: v6e
topology: v6e:2x2x1
jax: 0.10.0
libtpu: 0.0.40
codegen_flags: <defaults>
</compile_context>

<pallas_src>
import functools

import jax
import jax.numpy as jnp
from jax.experimental import pallas as pl
from jax.experimental.pallas import tpu as pltpu

LANES = 512                      # lane-dense last dim (multiple of 128)
MAX_BLOCK_BYTES = 4 * 1024 * 1024  # ~4 MiB per buffer per block
MIN_GRID_STEPS = 4               # let v7x's 2 TCs both get work on mid-size inputs
VMEM_LIMIT_BYTES = 40 * 1024 * 1024

_TRANSCENDENTALS_PER_ELEM = {1.0: 0, 2.0: 0, 0.5: 1, 0.25: 2, 0.75: 3}


def _pow_pos(base, alpha):
    """base**alpha for base > 0 (eps^2 > 0 guarantees positivity)."""
    if alpha == 1.0:
        return base
    if alpha == 2.0:
        return base * base
    if alpha == 0.5:
        return jnp.sqrt(base)                    # 1 EUP op instead of exp+log
    if alpha == 0.25:
        return jnp.sqrt(jnp.sqrt(base))
    if alpha == 0.75:
        s = jnp.sqrt(base)
        return s * jnp.sqrt(s)
    return jnp.exp(jnp.float32(alpha) * jnp.log(base))


def _charbonnier_kernel(x_ref, o_ref, *, epsilon, alpha):
    # Compute in f32 for accuracy of the exp/log path; kernel stays HBM-bound,
    # so the upcast is free VPU work.
    x = x_ref[...].astype(jnp.float32)
    base = x * x + jnp.float32(epsilon * epsilon)
    o_ref[...] = _pow_pos(base, alpha).astype(o_ref.dtype)


def _charbonnier_jnp(v, epsilon, alpha):
    vf = v.astype(jnp.float32)
    return (vf * vf + jnp.float32(epsilon * epsilon)) ** jnp.float32(alpha)


def _sublanes_for(dtype):
    itemsize = jnp.dtype(dtype).itemsize
    return 8 * max(1, 4 // itemsize)   # f32 -> 8, bf16 -> 16, int8/fp8 -> 32


def _pick_block_rows(rows, sublanes, itemsize):
    max_rows = max(sublanes, (MAX_BLOCK_BYTES // (LANES * itemsize)) // sublanes * sublanes)
    if rows <= sublanes:
        # Full-extent block (satisfies the (8,128) rule via "equals array dim").
        return rows
    # Aim for >= MIN_GRID_STEPS grid steps so the parallel axis can split
    # across both TensorCores on v7x; cap at the 4 MiB block.
    target = pl.cdiv(rows, MIN_GRID_STEPS)
    return min(max_rows, pl.cdiv(target, sublanes) * sublanes)


def charbonnier_penalty(x, epsilon=0.001, alpha=0.4):
    orig_shape = x.shape
    orig_dtype = x.dtype
    epsilon = float(epsilon)
    alpha = float(alpha)

    flat = x.reshape(-1)
    n = flat.shape[0]

    n_bulk = (n // LANES) * LANES
    n_tail = n - n_bulk

    if n_bulk == 0:
        # Fewer than 512 elements: a kernel launch is not worth it.
        return _charbonnier_jnp(flat, epsilon, alpha).astype(orig_dtype).reshape(orig_shape)

    bulk = flat[:n_bulk] if n_tail else flat
    rows = n_bulk // LANES
    x2d = bulk.reshape(rows, LANES)

    itemsize = jnp.dtype(orig_dtype).itemsize
    sublanes = _sublanes_for(orig_dtype)
    block_rows = _pick_block_rows(rows, sublanes, itemsize)
    grid = (pl.cdiv(rows, block_rows),)

    kernel = functools.partial(_charbonnier_kernel, epsilon=epsilon, alpha=alpha)

    n_trans = _TRANSCENDENTALS_PER_ELEM.get(alpha, 2)
    cost = pl.CostEstimate(
        flops=3 * n_bulk,
        transcendentals=n_trans * n_bulk,
        bytes_accessed=2 * n_bulk * itemsize,
    )

    out2d = pl.pallas_call(
        kernel,
        out_shape=jax.ShapeDtypeStruct((rows, LANES), orig_dtype),
        grid_spec=pltpu.PrefetchScalarGridSpec(
            num_scalar_prefetch=0,
            grid=grid,
            in_specs=[pl.BlockSpec((block_rows, LANES), lambda i: (i, 0))],
            out_specs=pl.BlockSpec((block_rows, LANES), lambda i: (i, 0)),
        ),
        compiler_params=pltpu.CompilerParams(
            dimension_semantics=("parallel",),
            vmem_limit_bytes=VMEM_LIMIT_BYTES,
        ),
        cost_estimate=cost,
    )(x2d)

    out_flat = out2d.reshape(-1)
    if n_tail:
        # <=511 elements; one concatenate is far cheaper than the old full
        # pad + slice round trip.
        tail_out = _charbonnier_jnp(flat[n_bulk:], epsilon, alpha).astype(orig_dtype)
        out_flat = jnp.concatenate([out_flat, tail_out])
    return out_flat.reshape(orig_shape)


def charbonnier_ref(x, epsilon=0.001, alpha=0.4):
    xf = x.astype(jnp.float32)
    return (xf * xf + jnp.float32(epsilon) ** 2) ** jnp.float32(alpha)


if __name__ == "__main__":
    key = jax.random.PRNGKey(0)

    # Primary case: NCHW image tensor, default alpha=0.4 (general exp/log path),
    # size is a multiple of 512 -> no tail, no extra copies.
    x = jax.random.normal(key, (2, 4, 16, 16), dtype=jnp.float32)
    out = jax.block_until_ready(charbonnier_penalty(x))
    ref = charbonnier_ref(x)
    assert out.shape == x.shape and out.dtype == x.dtype
    assert jnp.allclose(out, ref, rtol=1e-5, atol=1e-6), "mismatch vs reference (alpha=0.4)"

    # Ragged case: 660 elements -> 512-element bulk through the kernel +
    # 148-element jnp tail; alpha=0.5 exercises the sqrt fast path.
    k2 = jax.random.PRNGKey(1)
    x2 = jax.random.normal(k2, (2, 3, 10, 11), dtype=jnp.float32)
    out2 = jax.block_until_ready(charbonnier_penalty(x2, epsilon=0.001, alpha=0.5))
    ref2 = charbonnier_ref(x2, epsilon=0.001, alpha=0.5)
    assert out2.shape == x2.shape and out2.dtype == x2.dtype
    assert jnp.allclose(out2, ref2, rtol=1e-5, atol=1e-6), "mismatch vs reference (alpha=0.5)"

    print("KERNEL_OK")
</pallas_src>

<mosaic_0001>
module attributes {stable_mosaic.version = 11 : i64} {
  func.func @_charbonnier_kernel(%arg0: i32, %arg1: memref<4x512xf32, #tpu.memory_space<vmem>>, %arg2: memref<4x512xf32, #tpu.memory_space<vmem>>) attributes {dimension_semantics = [#tpu.dimension_semantics<parallel>], iteration_bounds = array<i64: 1>, scalar_prefetch = 0 : i64, scratch_operands = 0 : i64, tpu.core_type = #tpu.core_type<tc>, window_params = [{transform_indices = @transform_0, window_bounds = array<i64: 4, 512>}, {transform_indices = @transform_1, window_bounds = array<i64: 4, 512>}]} {
    %c0 = arith.constant 0 : index
    %c0_0 = arith.constant 0 : index
    %0 = vector.load %arg1[%c0, %c0_0] : memref<4x512xf32, #tpu.memory_space<vmem>>, vector<4x512xf32>
    %1 = arith.mulf %0, %0 : vector<4x512xf32>
    %cst = arith.constant 9.99999997E-7 : f32
    %2 = vector.broadcast %cst : f32 to vector<4x512xf32>
    %3 = arith.addf %1, %2 : vector<4x512xf32>
    %4 = math.log %3 : vector<4x512xf32>
    %cst_1 = arith.constant 4.000000e-01 : f32
    %5 = vector.broadcast %cst_1 : f32 to vector<4x512xf32>
    %6 = arith.mulf %5, %4 : vector<4x512xf32>
    %7 = math.exp %6 : vector<4x512xf32>
    %c0_2 = arith.constant 0 : index
    %c0_3 = arith.constant 0 : index
    %8 = vector.load %arg2[%c0_2, %c0_3] : memref<4x512xf32, #tpu.memory_space<vmem>>, vector<4x512xf32>
    tpu.vector_store %arg2[%c0_2, %c0_3], %7 {strides = array<i32>} : memref<4x512xf32, #tpu.memory_space<vmem>>, vector<4x512xf32>,
    return
  }
  func.func @transform_0(%arg0: i32) -> (i32, i32) {
    %c0_i32 = arith.constant 0 : i32
    %c0_i32_0 = arith.constant 0 : i32
    return %arg0, %c0_i32 : i32, i32
  }
  func.func @transform_1(%arg0: i32) -> (i32, i32) {
    %c0_i32 = arith.constant 0 : i32
    %c0_i32_0 = arith.constant 0 : i32
    return %arg0, %c0_i32 : i32, i32
  }
}

</mosaic_0001>

<llo_original>
// kernel: tpu_custom_call.1
$region0: #{tpu_custom_call.1}
  #allocation0 [shape = 'u32[]', space=smem, size = 0x4, offset = 0x4, fixed_abs, tag = 'smem constant byte address 0x4 - core index']
  #allocation1 [shape = 'u32[144,128]{1,0:T(1,128)}', space=vmem, size = 0x12000, scoped, tag = 'internal scratch']
  %s0 = inlined_call_operand.hbm [shape: f32[4,512], index: 0, kind: input, shape index: {}]
  %s1 = inlined_call_operand.hbm [shape: f32[4,512], index: 1, kind: output, shape index: {}]
  %s2 = sld [smem:[#allocation0]]
  $region18: #{tpu_custom_call.1} parent=0
    _
  %s4 = ssub.s32 1, %s2
  %s5 = scalar_select 0, %s4, %s2
  $region1: #{tpu_custom_call.1} parent=0
    #allocation2 [shape = 'u8[8192]{0}', space=vmem, size = 0x2000, scoped, tag = 'input window, operand 0, single buffered']
    #allocation3 [shape = 's32[1]{0}', space=sflag, size = 0x4, scoped, tag = 'scoped memory for tpu_custom_call.1']
    #allocation4 [shape = 's32[1]{0}', space=sflag, size = 0x4, scoped, tag = 'scoped memory for tpu_custom_call.1']
    #allocation5 [shape = 'u8[8192]{0}', space=vmem, size = 0x2000, scoped, tag = 'output window, operand 0, single buffered']
    %6 = vsyncpa [#allocation3], 0
    %7 = vsyncpa [#allocation4], 0
    // Predicated region
    $region2: #{tpu_custom_call.1} parent=1 // pred_check
      _
    $region3: #{tpu_custom_call.1} parent=1 // pred_check_branch
      %9 = sbr.rel (0) target = $region5
    $region4: #{tpu_custom_call.1} parent=1 // pred_region
      %s11 = ssub.s32 256, 256
      %12 = vsyncadd [#allocation3], %s11
      %s14 = sshll.u32 [#allocation2], 4
      %s15 = int_to_ptr.vmem [resolvable:$true] %s14
      %17 = dma.hbm_to_vmem [thread:$0]  %s0, 256, %s15, [#allocation3]
    $region5: #{tpu_custom_call.1} parent=1 // pred_fallthru
      _
    // Predicated region
    $region6: #{tpu_custom_call.1} parent=1 // pred_check
      _
    $region7: #{tpu_custom_call.1} parent=1 // pred_check_branch
      %19 = sbr.rel (0) target = $region9
    $region8: #{tpu_custom_call.1} parent=1 // pred_region
      %20 = dma.done [#allocation3], 256
    $region9: #{tpu_custom_call.1} parent=1 // pred_fallthru
      _
    %v21 = vld [vmem:[#allocation2] sm:$0xff]
    %v22 = vld [vmem:[#allocation2 + $0x8] sm:$0xff]
    %v23 = vmul.f32 %v21, %v21
    %v24 = vmul.f32 %v22, %v22
    %v25 = vadd.f32 %v23, 1e-06
    %v26 = vadd.f32 %v24, 1e-06
    %v27 = vlog2.pop %v25
    %v28 = vmul.f32 %v27, 0.6931472
    %v29 = vlog2.pop %v26
    %v30 = vmul.f32 %v29, 0.6931472
    %v31 = vmul.f32 %v28, 0.4
    %v32 = vmul.f32 %v30, 0.4
    %v33 = vmul.f32 %v31, 1.442695
    %v34 = vpow.pop %v33
    %v35 = vmul.f32 %v32, 1.442695
    %v36 = vpow.pop %v35
    %37 = vst [vmem:[#allocation5] sm:$0xff] %v34
    %38 = vst [vmem:[#allocation5 + $0x8] sm:$0xff] %v36
    // Predicated region
    $region10: #{tpu_custom_call.1} parent=1 // pred_check
      _
    $region11: #{tpu_custom_call.1} parent=1 // pred_check_branch
      %40 = sbr.rel (0) target = $region13
    $region12: #{tpu_custom_call.1} parent=1 // pred_region
      %s42 = ssub.s32 256, 256
      %43 = vsyncadd [#allocation4], %s42
      %s45 = sshll.u32 [#allocation5], 4
      %s46 = int_to_ptr.vmem [resolvable:$true] %s45
      %48 = dma.vmem_to_hbm [thread:$0]  %s46, 256, %s1, [#allocation4]
    $region13: #{tpu_custom_call.1} parent=1 // pred_fallthru
      _
    // Predicated region
    $region14: #{tpu_custom_call.1} parent=1 // pred_check
      _
    $region15: #{tpu_custom_call.1} parent=1 // pred_check_branch
      %50 = sbr.rel (0) target = $region17
    $region16: #{tpu_custom_call.1} parent=1 // pred_region
      %51 = dma.done [#allocation4], 256
    $region17: #{tpu_custom_call.1} parent=1 // pred_fallthru
      _
    %52 = vsyncpa [#allocation3], 1
    %53 = vsyncpa [#allocation4], 1

</llo_original>
